<compile_context>
chip_gen: v5e
topology: v5e:2x2
jax: 0.10.0
libtpu: 0.0.40
codegen_flags: <defaults>
</compile_context>

<pallas_src>
import numpy as np
import jax
import jax.numpy as jnp
from jax.experimental import pallas as pl
from jax.experimental.pallas import tpu as pltpu

CONCORDANCE_EPSILON = 1e-8
NEG_BIG = -1e30
OUT_LANES = 128


def _pick_tiles(batch_size):
    """Pick (N, TILE_ROWS, TILE_COLS) honoring the (8,128) block constraints."""
    lane = 128
    n = max(lane, ((batch_size + lane - 1) // lane) * lane)
    if n <= 512:
        tk = n                       # single column tile
    else:
        tk = 512
        n = ((n + tk - 1) // tk) * tk
    # >= 2 row tiles whenever possible so both v7x TensorCores get work.
    tr = 64 if n == lane else 128
    return n, tr, tk


def _deephit_partial_kernel(row_ref, col_ref, out_ref):
    """One (TR x TK) tile of the pairwise ranking matrix + per-row-tile sums.

    row_ref: (2, TK)  row 0 = survival times (original order, pad NEG_BIG)
                      row 1 = exp(s*r - c)   (original order, pad 0)
    col_ref: (TR, 8)  col 0 = event-masked exp(c - s*r) (original order, pad 0)
                      col 1 = survival times (original order, pad 0)
                      col 2 = likelihood terms e_i*(sr_i - lse_i) (sorted, pad 0)
    out_ref: (1, 8, OUT_LANES) partials: lane 0 = ll_sum, lane 1 = rank_sum
    """
    j = pl.program_id(1)                         # column-tile index (reduction axis)

    t_row = row_ref[0:1, :]                      # (1, TK)
    ep_row = row_ref[1:2, :]                     # (1, TK)  exp(s*r_b - c)
    en_col = col_ref[:, 0:1]                     # (TR, 1)  e_a * exp(c - s*r_a)
    t_col = col_ref[:, 1:2]                      # (TR, 1)

    # ranking: sum_b [t_a < t_b] * exp(s*r_b - c), then scale by masked exp_neg
    terms = jnp.where(t_col < t_row, ep_row, 0.0)          # (TR, TK)
    row_sum = jnp.sum(terms, axis=1, keepdims=True)        # (TR, 1)
    rank_partial = jnp.sum(en_col * row_sum)                # scalar

    sub = jax.lax.broadcasted_iota(jnp.int32, (1, 8, OUT_LANES), 1)
    lane = jax.lax.broadcasted_iota(jnp.int32, (1, 8, OUT_LANES), 2)

    def put(k, v):
        return jnp.where((sub == 0) & (lane == k), v, 0.0)

    @pl.when(j == 0)
    def _():
        # likelihood terms counted exactly once per row tile
        ll_partial = jnp.sum(col_ref[:, 2:3])
        out_ref[...] = put(0, ll_partial)

    out_ref[...] += put(1, rank_partial)


def deephit_loss(risk_scores, survival_times, event_indicators,
                 ranking_weight=0.2, ranking_scale=1.0):
    B = risk_scores.shape[0]
    N, TR, TK = _pick_tiles(B)
    num_row_tiles = N // TR
    num_col_tiles = N // TK
    pad = N - B

    risk = risk_scores.astype(jnp.float32)
    times = survival_times.astype(jnp.float32)
    events = event_indicators.astype(jnp.float32)
    ev_sum = jnp.sum(events)

    # ---- O(N log N) glue hoisted into the wrapper (per perf review) --------
    # Sort by survival time, descending (torch.argsort(..., descending=True)).
    order = jnp.argsort(-times)
    sr = risk[order]
    se = events[order]

    # Stable suffix logsumexp: lse[i] = logsumexp(sr[i:]).
    if hasattr(jax.lax, "cumlogsumexp"):
        lse = jax.lax.cumlogsumexp(sr, axis=0, reverse=True)
    else:  # fallback: global-max shift (less robust for huge risk spreads)
        m = jnp.max(sr)
        lse = m + jnp.log(jnp.cumsum(jnp.exp(sr - m)[::-1])[::-1])
    ll_terms = jnp.where(se > 0.5, sr - lse, 0.0)

    # Factored ranking exp: exp(s*(r_b - r_a)) = exp(s*r_b - c) * exp(c - s*r_a).
    rs = jnp.float32(ranking_scale) * risk
    c = 0.5 * (jnp.max(rs) + jnp.min(rs))          # range-balancing shift
    exp_pos = jnp.exp(rs - c)
    exp_neg = jnp.where(events > 0.5, jnp.exp(c - rs), 0.0)

    # pair_count = #{(a,b): e[a]==1, t[a] < t[b]} via rank of each time.
    ts_asc = jnp.sort(times)
    n_greater = (B - jnp.searchsorted(ts_asc, times, side="right")).astype(jnp.float32)
    pair_count = jnp.sum(jnp.where(events > 0.5, n_greater, 0.0))

    # ---- pack kernel inputs (1 row DMA + 1 column DMA per grid step) -------
    def padv(v, fill):
        return jnp.pad(v, (0, pad), constant_values=fill)

    row_pack = jnp.stack([padv(times, NEG_BIG), padv(exp_pos, 0.0)], axis=0)  # (2, N)
    col_pack = jnp.zeros((N, 8), jnp.float32)
    col_pack = col_pack.at[:, 0].set(padv(exp_neg, 0.0))
    col_pack = col_pack.at[:, 1].set(padv(times, 0.0))
    col_pack = col_pack.at[:, 2].set(padv(ll_terms, 0.0))

    partials = pl.pallas_call(
        _deephit_partial_kernel,
        out_shape=jax.ShapeDtypeStruct((num_row_tiles, 8, OUT_LANES), jnp.float32),
        grid=(num_row_tiles, num_col_tiles),
        in_specs=[pl.BlockSpec((2, TK), lambda i, j: (0, j)),     # packed rows
                  pl.BlockSpec((TR, 8), lambda i, j: (i, 0))],    # packed columns
        out_specs=pl.BlockSpec((1, 8, OUT_LANES), lambda i, j: (i, 0, 0)),
        compiler_params=pltpu.CompilerParams(
            dimension_semantics=("parallel", "arbitrary")),
    )(row_pack, col_pack)

    sums = jnp.sum(partials, axis=(0, 1))          # (OUT_LANES,)
    ll_sum, rank_sum = sums[0], sums[1]

    likelihood_loss = -ll_sum / (ev_sum + CONCORDANCE_EPSILON)
    ranking_loss = rank_sum / jnp.maximum(pair_count, 1.0)
    loss = likelihood_loss + ranking_weight * ranking_loss
    # Early-return case from the PyTorch module (no events): loss = 0.01
    return jnp.where(ev_sum == 0.0, jnp.float32(0.01), loss)


def _ref_deephit(risk, times, events, rw=0.2, rs=1.0):
    """NumPy reference mirroring the PyTorch forward."""
    risk = np.asarray(risk, np.float64)
    times = np.asarray(times, np.float64)
    events = np.asarray(events, np.float64)
    if events.sum() == 0:
        return 0.01
    B = len(times)
    order = np.argsort(-times)
    sr, se = risk[order], events[order]
    ll = 0.0
    for i in range(B):
        if se[i] == 1:
            rset = sr[i:]
            m = rset.max()
            ll += sr[i] - (m + np.log(np.exp(rset - m).sum()))
    ll = -ll / (events.sum() + CONCORDANCE_EPSILON)
    rloss, pc = 0.0, 0
    for i in range(B):
        for j in range(i + 1, B):
            if events[i] == 1 and times[i] < times[j]:
                rloss += np.exp(rs * (risk[j] - risk[i])); pc += 1
            elif events[j] == 1 and times[j] < times[i]:
                rloss += np.exp(rs * (risk[i] - risk[j])); pc += 1
    if pc > 0:
        rloss /= pc
    return ll + rw * rloss


if __name__ == "__main__":
    key = jax.random.PRNGKey(0)
    k1, k2 = jax.random.split(key)
    B = 8
    risk_scores = jax.random.normal(k1, (B,), jnp.float32)
    survival_times = jax.random.uniform(k2, (B,), jnp.float32, minval=0.1, maxval=10.0)
    event_indicators = jnp.array([1, 0, 1, 1, 0, 1, 0, 1], jnp.float32)

    loss = deephit_loss(risk_scores, survival_times, event_indicators,
                        ranking_weight=0.2, ranking_scale=1.0)
    loss = jax.block_until_ready(loss)

    ref = _ref_deephit(np.array(risk_scores), np.array(survival_times),
                       np.array(event_indicators), rw=0.2, rs=1.0)
    np.testing.assert_allclose(float(loss), ref, rtol=1e-3, atol=1e-5)
    print("KERNEL_OK")
</pallas_src>

<mosaic_0001>
module attributes {stable_mosaic.version = 11 : i64} {
  func.func @_deephit_partial_kernel(%arg0: i32, %arg1: i32, %arg2: memref<2x128xf32, #tpu.memory_space<vmem>>, %arg3: memref<64x8xf32, #tpu.memory_space<vmem>>, %arg4: memref<1x8x128xf32, #tpu.memory_space<vmem>>) attributes {dimension_semantics = [#tpu.dimension_semantics<parallel>, #tpu.dimension_semantics<arbitrary>], iteration_bounds = array<i64: 2, 1>, scalar_prefetch = 0 : i64, scratch_operands = 0 : i64, tpu.core_type = #tpu.core_type<tc>, window_params = [{transform_indices = @transform_0, window_bounds = array<i64: 2, 128>}, {transform_indices = @transform_1, window_bounds = array<i64: 64, 8>}, {transform_indices = @transform_2, window_bounds = array<i64: 1, 8, 128>}]} {
    %c0 = arith.constant 0 : index
    %c0_0 = arith.constant 0 : index
    %0 = vector.load %arg2[%c0, %c0_0] : memref<2x128xf32, #tpu.memory_space<vmem>>, vector<1x128xf32>
    %c1 = arith.constant 1 : index
    %c0_1 = arith.constant 0 : index
    %1 = vector.load %arg2[%c1, %c0_1] : memref<2x128xf32, #tpu.memory_space<vmem>>, vector<1x128xf32>
    %c0_2 = arith.constant 0 : index
    %c0_3 = arith.constant 0 : index
    %2 = vector.load %arg3[%c0_2, %c0_3] : memref<64x8xf32, #tpu.memory_space<vmem>>, vector<64x1xf32>
    %c0_4 = arith.constant 0 : index
    %c1_5 = arith.constant 1 : index
    %3 = vector.load %arg3[%c0_4, %c1_5] : memref<64x8xf32, #tpu.memory_space<vmem>>, vector<64x1xf32>
    %4 = vector.broadcast %3 : vector<64x1xf32> to vector<64x128xf32>
    %5 = vector.broadcast %0 : vector<1x128xf32> to vector<64x128xf32>
    %6 = arith.cmpf olt, %4, %5 : vector<64x128xf32>
    %cst = arith.constant 0.000000e+00 : f32
    %7 = vector.shape_cast %1 : vector<1x128xf32> to vector<1x128xf32>
    %8 = vector.broadcast %7 : vector<1x128xf32> to vector<64x128xf32>
    %9 = vector.broadcast %cst : f32 to vector<64x128xf32>
    %10 = arith.select %6, %8, %9 : vector<64x128xi1>, vector<64x128xf32>
    %cst_6 = arith.constant dense<0.000000e+00> : vector<64xf32>
    %11 = vector.multi_reduction <add>, %10, %cst_6 [1] : vector<64x128xf32> to vector<64xf32>
    %12 = vector.shape_cast %11 : vector<64xf32> to vector<64x1xf32>
    %13 = arith.mulf %2, %12 : vector<64x1xf32>
    %14 = vector.shape_cast %13 : vector<64x1xf32> to vector<1x64x1xf32>
    %cst_7 = arith.constant dense<0.000000e+00> : vector<1xf32>
    %15 = vector.multi_reduction <add>, %14, %cst_7 [1, 2] : vector<1x64x1xf32> to vector<1xf32>
    %16 = vector.shape_cast %15 : vector<1xf32> to vector<1x1x1xf32>
    %17 = vector.extract %16[0, 0, 0] : f32 from vector<1x1x1xf32>
    %18 = tpu.iota {dimensions = array<i32: 1>} : vector<1x8x128xi32>
    %19 = tpu.iota {dimensions = array<i32: 2>} : vector<1x8x128xi32>
    %c0_i32 = arith.constant 0 : i32
    %20 = arith.cmpi eq, %arg1, %c0_i32 : i32
    %21 = arith.extui %20 : i1 to i32
    %c0_i32_8 = arith.constant 0 : i32
    %22 = arith.cmpi ne, %21, %c0_i32_8 : i32
    scf.if %22 {
      %c0_17 = arith.constant 0 : index
      %c2 = arith.constant 2 : index
      %34 = vector.load %arg3[%c0_17, %c2] : memref<64x8xf32, #tpu.memory_space<vmem>>, vector<64x1xf32>
      %35 = vector.shape_cast %34 : vector<64x1xf32> to vector<1x64x1xf32>
      %cst_18 = arith.constant dense<0.000000e+00> : vector<1xf32>
      %36 = vector.multi_reduction <add>, %35, %cst_18 [1, 2] : vector<1x64x1xf32> to vector<1xf32>
      %37 = vector.shape_cast %36 : vector<1xf32> to vector<1x1x1xf32>
      %38 = vector.extract %37[0, 0, 0] : f32 from vector<1x1x1xf32>
      %c0_i32_19 = arith.constant 0 : i32
      %39 = vector.broadcast %c0_i32_19 : i32 to vector<1x8x128xi32>
      %40 = arith.cmpi eq, %18, %39 : vector<1x8x128xi32>
      %c0_i32_20 = arith.constant 0 : i32
      %41 = vector.broadcast %c0_i32_20 : i32 to vector<1x8x128xi32>
      %42 = arith.cmpi eq, %19, %41 : vector<1x8x128xi32>
      %43 = arith.andi %40, %42 : vector<1x8x128xi1>
      %cst_21 = arith.constant 0.000000e+00 : f32
      %44 = vector.broadcast %38 : f32 to vector<1x8x128xf32>
      %45 = vector.broadcast %cst_21 : f32 to vector<1x8x128xf32>
      %46 = arith.select %43, %44, %45 : vector<1x8x128xi1>, vector<1x8x128xf32>
      %c0_22 = arith.constant 0 : index
      %c0_23 = arith.constant 0 : index
      %c0_24 = arith.constant 0 : index
      %47 = vector.load %arg4[%c0_22, %c0_23, %c0_24] : memref<1x8x128xf32, #tpu.memory_space<vmem>>, vector<1x8x128xf32>
      tpu.vector_store %arg4[%c0_22, %c0_23, %c0_24], %46 {strides = array<i32>} : memref<1x8x128xf32, #tpu.memory_space<vmem>>, vector<1x8x128xf32>,
    } else {
    }
    %c0_9 = arith.constant 0 : index
    %c0_10 = arith.constant 0 : index
    %c0_11 = arith.constant 0 : index
    %23 = vector.load %arg4[%c0_9, %c0_10, %c0_11] : memref<1x8x128xf32, #tpu.memory_space<vmem>>, vector<1x8x128xf32>
    %c0_i32_12 = arith.constant 0 : i32
    %24 = vector.broadcast %c0_i32_12 : i32 to vector<1x8x128xi32>
    %25 = arith.cmpi eq, %18, %24 : vector<1x8x128xi32>
    %c1_i32 = arith.constant 1 : i32
    %26 = vector.broadcast %c1_i32 : i32 to vector<1x8x128xi32>
    %27 = arith.cmpi eq, %19, %26 : vector<1x8x128xi32>
    %28 = arith.andi %25, %27 : vector<1x8x128xi1>
    %cst_13 = arith.constant 0.000000e+00 : f32
    %29 = vector.broadcast %17 : f32 to vector<1x8x128xf32>
    %30 = vector.broadcast %cst_13 : f32 to vector<1x8x128xf32>
    %31 = arith.select %28, %29, %30 : vector<1x8x128xi1>, vector<1x8x128xf32>
    %32 = arith.addf %23, %31 : vector<1x8x128xf32>
    %c0_14 = arith.constant 0 : index
    %c0_15 = arith.constant 0 : index
    %c0_16 = arith.constant 0 : index
    %33 = vector.load %arg4[%c0_14, %c0_15, %c0_16] : memref<1x8x128xf32, #tpu.memory_space<vmem>>, vector<1x8x128xf32>
    tpu.vector_store %arg4[%c0_14, %c0_15, %c0_16], %32 {strides = array<i32>} : memref<1x8x128xf32, #tpu.memory_space<vmem>>, vector<1x8x128xf32>,
    return
  }
  func.func @transform_0(%arg0: i32, %arg1: i32) -> (i32, i32) {
    %c0_i32 = arith.constant 0 : i32
    %c0_i32_0 = arith.constant 0 : i32
    return %c0_i32, %arg1 : i32, i32
  }
  func.func @transform_1(%arg0: i32, %arg1: i32) -> (i32, i32) {
    %c0_i32 = arith.constant 0 : i32
    %c0_i32_0 = arith.constant 0 : i32
    return %arg0, %c0_i32 : i32, i32
  }
  func.func @transform_2(%arg0: i32, %arg1: i32) -> (i32, i32, i32) {
    %c0_i32 = arith.constant 0 : i32
    %c0_i32_0 = arith.constant 0 : i32
    %c0_i32_1 = arith.constant 0 : i32
    return %arg0, %c0_i32, %c0_i32_0 : i32, i32, i32
  }
}

</mosaic_0001>

<llo_original>
// kernel: tpu_custom_call.1
$region0: #{tpu_custom_call.1}
  #allocation0 [shape = 'u32[]', space=smem, size = 0x4, offset = 0x4, fixed_abs, tag = 'smem constant byte address 0x4 - core index']
  #allocation1 [shape = 'u32[72,128]{1,0:T(1,128)}', space=vmem, size = 0x9000, scoped, tag = 'internal scratch']
  %s0 = inlined_call_operand.vmem [shape: f32[2,128], index: 0, kind: input, shape index: {}]
  %s1 = inlined_call_operand.vmem [shape: f32[128,8], index: 1, kind: input, shape index: {}]
  %s2 = inlined_call_operand.hbm [shape: f32[2,8,128], index: 2, kind: output, shape index: {}]
  %s3 = sld [smem:[#allocation0]]
  $region45: #{tpu_custom_call.1} parent=0
    _
  %s5 = ssub.s32 1, %s3
  %s6 = scalar_select 0, %s5, %s3
  $region1: #{tpu_custom_call.1} parent=0
    #allocation2 [shape = 'u8[8192]{0}', space=vmem, size = 0x2000, scoped, tag = 'output window, operand 0']
    #allocation3 [shape = 's32[2]{0}', space=sflag, size = 0x8, scoped, tag = 'scoped memory for tpu_custom_call.1']
    %7 = vsyncpa [#allocation3], 0
    %s8 = scalar_lea.sflag [#allocation3], 1
    %9 = vsyncpa %s8, 0
    loop: start=0, step=1, limit=4
    $region2: #{tpu_custom_call.1} parent=1 // loop_pre_header
      _
    $region3: #{tpu_custom_call.1} parent=1 // loop_header
      %s11 = sphi 0, %s15
      %p12 = scmp.ge.s32.totalorder %s11, 4
      %s18 = sphi 0, %s30
      %s19 = sphi 0, %s26
      %s20 = sphi 0, %s18
      %s21 = sphi 0, %s19
      %s22 = sphi 0, %s20
      %s23 = sphi 0, %s21
      %s33 = sphi 0, %s35
      %s36 = sphi 0, %s33
      %s37 = sphi 0, %s36
      %s53 = sphi 0, %s37
      %s59 = sphi 0, %s61
      %s62 = sphi 0, %s59
      %s63 = sphi 0, %s62
      %s79 = sphi 0, %s63
      %s85 = sphi 0, %s87
      %s88 = sphi 0, %s85
      %s89 = sphi 0, %s88
      %s105 = sphi 0, %s89
    $region4: #{tpu_custom_call.1} parent=1 // loop_header_branch
      %14 = sbr.rel (%p12) target = $region8
    $region5: #{tpu_custom_call.1} parent=1 // loop_body
      %s16 = ssub.s32 %s11, 1
      %s17 = ssub.s32 %s11, 2
      %s24 = sadd.s32 1, %s19
      %p25 = scmp.ge.s32.totalorder %s24, 1
      %s26 = scalar_select %p25, 0, %s24
      %s27 = sadd.s32 1, %s18
      %s28 = scalar_select %p25, %s27, %s18
      %p29 = scmp.ge.s32.totalorder %s28, 2
      %s30 = scalar_select %p29, 0, %s28
      %s31 = ssub.s32 %s19, %s26
      %p32 = scmp.eq.s32.totalorder %s31, 0
      %s34 = sadd.s32 %s33, 1
      %s35 = scalar_select %p32, %s33, %s34
      %p38 = pneg %p32
      %p39 = scmp.eq.s32.totalorder %s11, 1
      %p40 = por %p38, %p39
      %p41 = scmp.ne.s32.totalorder %s33, %s36
      %p42 = scmp.eq.s32.totalorder %s11, 0
      %p43 = por %p41, %p42
      %p44 = scmp.ne.s32.totalorder %s33, %s36
      %p45 = scmp.eq.s32.totalorder %s16, 1
      %p46 = por %p44, %p45
      %p47 = scmp.ne.s32.totalorder %s36, %s37
      %p48 = scmp.eq.s32.totalorder %s16, 0
      %p49 = por %p47, %p48
      %p50 = scmp.ne.s32.totalorder %s36, %s37
      %p51 = scmp.eq.s32.totalorder %s17, 1
      %p52 = por %p50, %p51
      %p54 = scmp.ne.s32.totalorder %s37, %s53
      %p55 = scmp.eq.s32.totalorder %s17, 0
      %p56 = por %p54, %p55
      %s57 = ssub.s32 %s18, %s30
      %p58 = scmp.eq.s32.totalorder %s57, 0
      %s60 = sadd.s32 %s59, 1
      %s61 = scalar_select %p58, %s59, %s60
      %p64 = pneg %p58
      %p65 = scmp.eq.s32.totalorder %s11, 1
      %p66 = por %p64, %p65
      %p67 = scmp.ne.s32.totalorder %s59, %s62
      %p68 = scmp.eq.s32.totalorder %s11, 0
      %p69 = por %p67, %p68
      %p70 = scmp.ne.s32.totalorder %s59, %s62
      %p71 = scmp.eq.s32.totalorder %s16, 1
      %p72 = por %p70, %p71
      %p73 = scmp.ne.s32.totalorder %s62, %s63
      %p74 = scmp.eq.s32.totalorder %s16, 0
      %p75 = por %p73, %p74
      %p76 = scmp.ne.s32.totalorder %s62, %s63
      %p77 = scmp.eq.s32.totalorder %s17, 1
      %p78 = por %p76, %p77
      %p80 = scmp.ne.s32.totalorder %s63, %s79
      %p81 = scmp.eq.s32.totalorder %s17, 0
      %p82 = por %p80, %p81
      %s83 = ssub.s32 %s18, %s30
      %p84 = scmp.eq.s32.totalorder %s83, 0
      %s86 = sadd.s32 %s85, 1
      %s87 = scalar_select %p84, %s85, %s86
      %p90 = pneg %p84
      %p91 = scmp.eq.s32.totalorder %s11, 1
      %p92 = por %p90, %p91
      %p93 = scmp.ne.s32.totalorder %s85, %s88
      %p94 = scmp.eq.s32.totalorder %s11, 0
      %p95 = por %p93, %p94
      %p96 = scmp.ne.s32.totalorder %s85, %s88
      %p97 = scmp.eq.s32.totalorder %s16, 1
      %p98 = por %p96, %p97
      %p99 = scmp.ne.s32.totalorder %s88, %s89
      %p100 = scmp.eq.s32.totalorder %s16, 0
      %p101 = por %p99, %p100
      %p102 = scmp.ne.s32.totalorder %s88, %s89
      %p103 = scmp.eq.s32.totalorder %s17, 1
      %p104 = por %p102, %p103
      %p106 = scmp.ne.s32.totalorder %s89, %s105
      %p107 = scmp.eq.s32.totalorder %s17, 0
      %p108 = por %p106, %p107
      %p109 = scmp.le.s32.totalorder 1, %s11
      %p110 = scmp.lt.s32.totalorder %s11, 3
      %p111 = pnand %p109, %p110
      %p112 = pneg %p111
      // Predicated region
      $region9: #{tpu_custom_call.1} parent=5 // pred_check
        _
      $region10: #{tpu_custom_call.1} parent=5 // pred_check_branch
        %114 = sbr.rel (%p111) target = $region12
      $region11: #{tpu_custom_call.1} parent=5 // pred_region
        %s115 = ssub.s32 %s11, 1
        // Predicated region
        $region13: #{tpu_custom_call.1} parent=11 // pred_check
          %p116 = pneg %p49
        $region14: #{tpu_custom_call.1} parent=11 // pred_check_branch
          %118 = sbr.rel (%p116) target = $region16
        $region15: #{tpu_custom_call.1} parent=11 // pred_region
          %p119 = scmp.lt.s32.totalorder %s21, 0
          %s120 = scalar_select %p119, %s21, 0
          %s121 = smul.addr %s120, 2
          %s122 = scalar_lea.vmem %s0, %s121
        $region16: #{tpu_custom_call.1} parent=11 // pred_fallthru
          _
      $region12: #{tpu_custom_call.1} parent=5 // pred_fallthru
        _
      %p123 = scmp.lt.s32.totalorder %s11, 2
      // Predicated region
      $region17: #{tpu_custom_call.1} parent=5 // pred_check
        %p124 = pneg %p123
      $region18: #{tpu_custom_call.1} parent=5 // pred_check_branch
        %126 = sbr.rel (%p124) target = $region20
      $region19: #{tpu_custom_call.1} parent=5 // pred_region
        // Predicated region
        $region21: #{tpu_custom_call.1} parent=19 // pred_check
          %p127 = pneg %p69
        $region22: #{tpu_custom_call.1} parent=19 // pred_check_branch
          %129 = sbr.rel (%p127) target = $region24
        $region23: #{tpu_custom_call.1} parent=19 // pred_region
          %s130 = smul.u32 8, %s18
          %p131 = scmp.lt.s32.totalorder %s130, 15
          %s132 = scalar_select %p131, %s130, 15
          %s133 = smul.addr %s132, 8
          %s134 = scalar_lea.vmem %s1, %s133
          %s135 = smul.u32 8, %s18
        $region24: #{tpu_custom_call.1} parent=19 // pred_fallthru
          _
      $region20: #{tpu_custom_call.1} parent=5 // pred_fallthru
        _
      %p136 = scmp.le.s32.totalorder 1, %s11
      %p137 = scmp.lt.s32.totalorder %s11, 3
      %p138 = pnand %p136, %p137
      %p139 = pneg %p138
      // Predicated region
      $region25: #{tpu_custom_call.1} parent=5 // pred_check
        _
      $region26: #{tpu_custom_call.1} parent=5 // pred_check_branch
        %141 = sbr.rel (%p138) target = $region28
      $region27: #{tpu_custom_call.1} parent=5 // pred_region
        %s142 = ssub.s32 %s11, 1
        %p143 = scmp.lt.s32.totalorder %s21, 0
        %s144 = scalar_select %p143, %s21, 0
        %s145 = smul.addr %s144, 2
        %s146 = scalar_lea.vmem %s0, %s145
        %p147 = pneg %p49
        %p148 = pneg %p46
        %s149 = smul.u32 8, %s20
        %p150 = scmp.lt.s32.totalorder %s149, 15
        %s151 = scalar_select %p150, %s149, 15
        %s152 = smul.addr %s151, 8
        %s153 = scalar_lea.vmem %s1, %s152
        %p154 = pneg %p75
        %p155 = pneg %p72
        %p156 = pneg %p101
        %p157 = pneg %p98
        %s158 = sand.u32 %s88, 1
        %s159 = scalar_lea.sflag [#allocation3], %s158
        %s160 = sand.u32 %s88, 1
        %s161 = smul.addr %s160, 8
        %s162 = scalar_lea.vmem [#allocation2], %s161
        %p163 = scmp.lt.s32.totalorder %s21, 0
        %s164 = scalar_select %p163, %s21, 0
        %s165 = smul.addr %s164, 2
        %s166 = scalar_lea.vmem %s0, %s165
        %s167 = smul.u32 8, %s20
        %p168 = scmp.lt.s32.totalorder %s167, 15
        %s169 = scalar_select %p168, %s167, 15
        %s170 = smul.addr %s169, 8
        %s171 = scalar_lea.vmem %s1, %s170
        %s172 = smul.u32 8, %s20
        %v173 = vld [vmem:[%s166] sm:$0x1]
        %v174 = vld [vmem:[%s166 + $0x1] sm:$0x1]
        %v175 = vld [vmem:[%s171] sm:$0xff]
        %v176 = vld [vmem:[%s171 + $0x8] sm:$0xff]
        %v177 = vld [vmem:[%s171 + $0x10] sm:$0xff]
        %v178 = vld [vmem:[%s171 + $0x18] sm:$0xff]
        %v179 = vld [vmem:[%s171 + $0x20] sm:$0xff]
        %v180 = vld [vmem:[%s171 + $0x28] sm:$0xff]
        %v181 = vld [vmem:[%s171 + $0x30] sm:$0xff]
        %v182 = vld [vmem:[%s171 + $0x38] sm:$0xff]
        %184 = vset.pattern.permute.xlu0 1
        %185 = vperm.xlu0 %184, %v175
        %v186 = vpop.permute.xlu0 %185
        %189 = vset.pattern.permute.xlu0 1
        %190 = vperm.xlu0 %189, %v176
        %v191 = vpop.permute.xlu0 %190
        %194 = vset.pattern.permute.xlu0 1
        %195 = vperm.xlu0 %194, %v177
        %v196 = vpop.permute.xlu0 %195
        %199 = vset.pattern.permute.xlu0 1
        %200 = vperm.xlu0 %199, %v178
        %v201 = vpop.permute.xlu0 %200
        %204 = vset.pattern.permute.xlu0 1
        %205 = vperm.xlu0 %204, %v179
        %v206 = vpop.permute.xlu0 %205
        %209 = vset.pattern.permute.xlu0 1
        %210 = vperm.xlu0 %209, %v180
        %v211 = vpop.permute.xlu0 %210
        %214 = vset.pattern.permute.xlu0 1
        %215 = vperm.xlu0 %214, %v181
        %v216 = vpop.permute.xlu0 %215
        %219 = vset.pattern.permute.xlu0 1
        %220 = vperm.xlu0 %219, %v182
        %v221 = vpop.permute.xlu0 %220
        %v223 = vperm.slane %v173, 0
        %vm224 = vcmp.lt.f32.partialorder %v186, %v223
        %vm225 = vcmp.lt.f32.partialorder %v191, %v223
        %vm226 = vcmp.lt.f32.partialorder %v196, %v223
        %vm227 = vcmp.lt.f32.partialorder %v201, %v223
        %vm228 = vcmp.lt.f32.partialorder %v206, %v223
        %vm229 = vcmp.lt.f32.partialorder %v211, %v223
        %vm230 = vcmp.lt.f32.partialorder %v216, %v223
        %vm231 = vcmp.lt.f32.partialorder %v221, %v223
        %v232 = vperm.slane %v174, 0
        %v233 = vsel %vm224, %v232, 0.0
        %v234 = vsel %vm225, %v232, 0.0
        %v235 = vsel %vm226, %v232, 0.0
        %v236 = vsel %vm227, %v232, 0.0
        %v237 = vsel %vm228, %v232, 0.0
        %v238 = vsel %vm229, %v232, 0.0
        %v239 = vsel %vm230, %v232, 0.0
        %v240 = vsel %vm231, %v232, 0.0
        %241 = vadd.xlane.f32.xlu0 %v233
        %v242 = vpop.xlane.xlu0 %241
        %243 = vadd.xlane.f32.xlu0 %v234
        %v244 = vpop.xlane.xlu0 %243
        %245 = vadd.xlane.f32.xlu0 %v235
        %v246 = vpop.xlane.xlu0 %245
        %247 = vadd.xlane.f32.xlu0 %v236
        %v248 = vpop.xlane.xlu0 %247
        %249 = vadd.xlane.f32.xlu0 %v237
        %v250 = vpop.xlane.xlu0 %249
        %251 = vadd.xlane.f32.xlu0 %v238
        %v252 = vpop.xlane.xlu0 %251
        %253 = vadd.xlane.f32.xlu0 %v239
        %v254 = vpop.xlane.xlu0 %253
        %255 = vadd.xlane.f32.xlu0 %v240
        %v256 = vpop.xlane.xlu0 %255
        %v257 = vmul.f32 %v175, %v242
        %v258 = vmul.f32 %v176, %v244
        %v259 = vmul.f32 %v177, %v246
        %v260 = vmul.f32 %v178, %v248
        %v261 = vmul.f32 %v179, %v250
        %v262 = vmul.f32 %v180, %v252
        %v263 = vmul.f32 %v181, %v254
        %v264 = vmul.f32 %v182, %v256
        %vm265 = vcmask 7168
        %v266 = vsel %vm265, %v257, 0.0
        %v267 = vsel %vm265, %v258, 0.0
        %v268 = vadd.f32 %v266, %v267
        %v269 = vsel %vm265, %v259, 0.0
        %v270 = vadd.f32 %v268, %v269
        %v271 = vsel %vm265, %v260, 0.0
        %v272 = vadd.f32 %v270, %v271
        %v273 = vsel %vm265, %v261, 0.0
        %v274 = vadd.f32 %v272, %v273
        %v275 = vsel %vm265, %v262, 0.0
        %v276 = vadd.f32 %v274, %v275
        %v277 = vsel %vm265, %v263, 0.0
        %v278 = vadd.f32 %v276, %v277
        %v279 = vsel %vm265, %v264, 0.0
        %v280 = vadd.f32 %v278, %v279
        %281 = vadd.xlane.f32.xlu0 %v280
        %v282 = vpop.xlane.xlu0 %281
        %v283 = vrot.slane %v282, 4
        %v284 = vadd.f32 %v282, %v283
        %v285 = vrot.slane %v284, 2
        %v286 = vadd.f32 %v284, %v285
        %v287 = vrot.slane %v286, 1
        %v288 = vadd.f32 %v286, %v287
        %s289 = vtos %v288
        %v290 = vlaneseq
        %v291 = vshrl.u32 %v290, 7
        %v292 = vlaneseq
        %v293 = vand.u32 %v292, 127
        %p294 = scmp.eq.s32.totalorder %s21, 0
        // Predicated region
        $region29: #{tpu_custom_call.1} parent=27 // pred_check
          %p295 = pneg %p294
        $region30: #{tpu_custom_call.1} parent=27 // pred_check_branch
          %297 = sbr.rel (%p295) target = $region32
        $region31: #{tpu_custom_call.1} parent=27 // pred_region
          %v298 = vld [vmem:[%s171] sm:$0xff]
          %v299 = vld [vmem:[%s171 + $0x8] sm:$0xff]
          %v300 = vld [vmem:[%s171 + $0x10] sm:$0xff]
          %v301 = vld [vmem:[%s171 + $0x18] sm:$0xff]
          %v302 = vld [vmem:[%s171 + $0x20] sm:$0xff]
          %v303 = vld [vmem:[%s171 + $0x28] sm:$0xff]
          %v304 = vld [vmem:[%s171 + $0x30] sm:$0xff]
          %v305 = vld [vmem:[%s171 + $0x38] sm:$0xff]
          %314 = vrot.lane.b32.xlu0 %v298, 126
          %v315 = vpop.permute.xlu0 %314
          %316 = vrot.lane.b32.xlu0 %v299, 126
          %v317 = vpop.permute.xlu0 %316
          %318 = vrot.lane.b32.xlu0 %v300, 126
          %v319 = vpop.permute.xlu0 %318
          %320 = vrot.lane.b32.xlu0 %v301, 126
          %v321 = vpop.permute.xlu0 %320
          %322 = vrot.lane.b32.xlu0 %v302, 126
          %v323 = vpop.permute.xlu0 %322
          %324 = vrot.lane.b32.xlu0 %v303, 126
          %v325 = vpop.permute.xlu0 %324
          %326 = vrot.lane.b32.xlu0 %v304, 126
          %v327 = vpop.permute.xlu0 %326
          %328 = vrot.lane.b32.xlu0 %v305, 126
          %v329 = vpop.permute.xlu0 %328
          %v338 = vsel %vm265, %v315, 0.0
          %v339 = vsel %vm265, %v317, 0.0
          %v340 = vadd.f32 %v338, %v339
          %v341 = vsel %vm265, %v319, 0.0
          %v342 = vadd.f32 %v340, %v341
          %v343 = vsel %vm265, %v321, 0.0
          %v344 = vadd.f32 %v342, %v343
          %v345 = vsel %vm265, %v323, 0.0
          %v346 = vadd.f32 %v344, %v345
          %v347 = vsel %vm265, %v325, 0.0
          %v348 = vadd.f32 %v346, %v347
          %v349 = vsel %vm265, %v327, 0.0
          %v350 = vadd.f32 %v348, %v349
          %v351 = vsel %vm265, %v329, 0.0
          %v352 = vadd.f32 %v350, %v351
          %353 = vadd.xlane.f32.xlu0 %v352
          %v354 = vpop.xlane.xlu0 %353
          %v355 = vrot.slane %v354, 4
          %v356 = vadd.f32 %v354, %v355
          %v357 = vrot.slane %v356, 2
          %v358 = vadd.f32 %v356, %v357
          %v359 = vrot.slane %v358, 1
          %v360 = vadd.f32 %v358, %v359
          %s361 = vtos %v360
          %vm362 = vcmp.eq.s32.totalorder %v291, 0
          %vm363 = vcmp.eq.s32.totalorder %v293, 0
          %vm364 = vmand %vm362, %vm363
          %v365 = vstv %s361
          %v366 = vsel %vm364, %v365, 0.0
          %367 = vst [vmem:[%s162] sm:$0xff] %v366
        $region32: #{tpu_custom_call.1} parent=27 // pred_fallthru
          _
        %v368 = vld [vmem:[%s162] sm:$0xff]
        %vm369 = vcmp.eq.s32.totalorder %v291, 0
        %vm370 = vcmp.eq.s32.totalorder %v293, 1
        %vm371 = vmand %vm369, %vm370
        %v372 = vstv %s289
        %v373 = vsel %vm371, %v372, 0.0
        %v374 = vadd.f32 %v368, %v373
        %375 = vst [vmem:[%s162] sm:$0xff] %v374
        %s376 = sand.u32 %s88, 1
        %s377 = scalar_lea.sflag [#allocation3], %s376
        %s378 = sand.u32 %s88, 1
        %s379 = smul.addr %s378, 8
        %s380 = scalar_lea.vmem [#allocation2], %s379
        // Predicated region
        $region33: #{tpu_custom_call.1} parent=27 // pred_check
          %p381 = pneg %p98
        $region34: #{tpu_custom_call.1} parent=27 // pred_check_branch
          %383 = sbr.rel (%p381) target = $region36
        $region35: #{tpu_custom_call.1} parent=27 // pred_region
          %385 = vsyncadd %s377, 0
          %s386 = smul.addr %s20, 8
          %s387 = scalar_lea.hbm %s2, %s386
          %s389 = sshll.u32 %s380, 4
          %s390 = int_to_ptr.vmem [resolvable:$true] %s389
          %s391 = sshll.u32 %s387, 4
          %s392 = int_to_ptr.hbm [resolvable:$true] %s391
          %394 = dma.vmem_to_hbm [thread:$0]  %s390, 128, %s392, %s377
        $region36: #{tpu_custom_call.1} parent=27 // pred_fallthru
          _
      $region28: #{tpu_custom_call.1} parent=5 // pred_fallthru
        _
      %p395 = scmp.le.s32.totalorder 2, %s11
      // Predicated region
      $region37: #{tpu_custom_call.1} parent=5 // pred_check
        %p396 = pneg %p395
      $region38: #{tpu_custom_call.1} parent=5 // pred_check_branch
        %398 = sbr.rel (%p396) target = $region40
      $region39: #{tpu_custom_call.1} parent=5 // pred_region
        %s399 = ssub.s32 %s11, 2
        // Predicated region
        $region41: #{tpu_custom_call.1} parent=39 // pred_check
          %p400 = pneg %p104
        $region42: #{tpu_custom_call.1} parent=39 // pred_check_branch
          %402 = sbr.rel (%p400) target = $region44
        $region43: #{tpu_custom_call.1} parent=39 // pred_region
          %s403 = sand.u32 %s89, 1
          %s404 = scalar_lea.sflag [#allocation3], %s403
          %s405 = sand.u32 %s89, 1
          %s406 = smul.addr %s405, 8
          %s407 = scalar_lea.vmem [#allocation2], %s406
          %409 = dma.done %s404, 128
        $region44: #{tpu_custom_call.1} parent=39 // pred_fallthru
          _
      $region40: #{tpu_custom_call.1} parent=5 // pred_fallthru
        _
    $region6: #{tpu_custom_call.1} parent=1 // loop_footer
      %s15 = sadd.s32 1, %s11
    $region7: #{tpu_custom_call.1} parent=1 // loop_footer_branch
      %10 = sbr.rel target = $region3
    $region8: #{tpu_custom_call.1} parent=1 // loop_exit
      _
    %410 = vsyncpa [#allocation3], 1
    %s411 = scalar_lea.sflag [#allocation3], 1
    %412 = vsyncpa %s411, 1

</llo_original>
